<compile_context>
chip_gen: v7x
topology: tpu7x:2x2x1
jax: 0.10.0
libtpu: 0.0.40
codegen_flags: <defaults>
</compile_context>

<pallas_src>
import jax
import jax.numpy as jnp
from jax import lax
from jax.experimental import pallas as pl
from jax.experimental.pallas import tpu as pltpu


# ----------------------------------------------------------------------------
# Main (single-pass) kernel: one block holds all of (B, HW) for a channel tile.
# ----------------------------------------------------------------------------
def _bn2d_kernel(x_ref, gamma_ref, beta_ref, o_ref):
    # x_ref: (B, tc, HW) in the input dtype; gamma_ref/beta_ref: (1, tc, 1) f32.
    B = x_ref.shape[0]
    HW = x_ref.shape[2]
    n = B * HW
    inv_n = jnp.float32(1.0 / n)
    # NOTE: torch.var uses ddof=1; n == 1 gives nan, matching torch.
    inv_nm1 = jnp.float32(1.0 / (n - 1)) if n > 1 else jnp.float32(jnp.nan)

    xf = x_ref[...].astype(jnp.float32)

    # Pass 1: mean.  Batch axis first (VPU adds), lane axis last so there is a
    # single cross-lane XLU reduce per channel tile instead of B of them.
    sb = jnp.sum(xf, axis=0, keepdims=True)                 # (1, tc, HW)
    mean = jnp.sum(sb, axis=2, keepdims=True) * inv_n       # (1, tc, 1)

    # Pass 2: two-pass (diff-based) unbiased variance — avoids the catastrophic
    # cancellation of the one-pass sum/sumsq form.
    diff = xf - mean                                        # (B, tc, HW)
    sqb = jnp.sum(diff * diff, axis=0, keepdims=True)       # (1, tc, HW)
    var = jnp.sum(sqb, axis=2, keepdims=True) * inv_nm1     # (1, tc, 1)

    inv_std = lax.rsqrt(var + jnp.float32(1e-20))           # (1, tc, 1)

    # Fold the per-channel affine into a single scale/shift elementwise pass.
    scale = gamma_ref[...] * inv_std
    shift = beta_ref[...] - mean * scale
    o_ref[...] = (xf * scale + shift).astype(o_ref.dtype)


# ----------------------------------------------------------------------------
# Chunked fallback kernels (batch axis is a reduction grid axis).
# ----------------------------------------------------------------------------
def _sum_kernel(x_ref, sum_ref):
    # x_ref: (1, tc, HW); sum_ref: (tc, 1) f32 accumulator (resident across b).
    @pl.when(pl.program_id(1) == 0)
    def _():
        sum_ref[...] = jnp.zeros_like(sum_ref)

    xf = x_ref[0].astype(jnp.float32)                       # (tc, HW)
    sum_ref[...] += jnp.sum(xf, axis=1, keepdims=True)      # (tc, 1)


def _ssq_kernel(x_ref, mean_ref, ssq_ref):
    # Two-pass variance: sum of squared diffs about a precomputed per-channel mean.
    @pl.when(pl.program_id(1) == 0)
    def _():
        ssq_ref[...] = jnp.zeros_like(ssq_ref)

    xf = x_ref[0].astype(jnp.float32)                       # (tc, HW)
    d = xf - mean_ref[...]                                  # (tc, HW) - (tc, 1)
    ssq_ref[...] += jnp.sum(d * d, axis=1, keepdims=True)   # (tc, 1)


def _apply_kernel(x_ref, scale_ref, shift_ref, o_ref):
    xf = x_ref[0].astype(jnp.float32)                       # (tc, HW)
    y = xf * scale_ref[...] + shift_ref[...]                # (tc, HW)
    o_ref[...] = y[None].astype(o_ref.dtype)                # (1, tc, HW)


# ----------------------------------------------------------------------------
# Tiling / VMEM policy.
# ----------------------------------------------------------------------------
def _tpu_vmem_bytes():
    try:
        return int(pltpu.get_tpu_info().vmem_capacity_bytes)
    except Exception:
        return 64 * 1024 * 1024  # conservative (v7x per-TensorCore VMEM)


def _resident_bytes(B, tc, HW, itemsize):
    # 2 double-buffered input blocks + 2 output blocks (input dtype) plus
    # ~3 block-equivalents of f32 in-kernel temporaries (xf/diff/partial sums).
    return B * tc * HW * (4 * itemsize + 12)


def _choose_channel_tile(B, C, HW, itemsize, budget_bytes):
    """Smallest channel tile whose x block is 'big enough' (>= ~4 MiB) while
    giving >= 2 grid steps; tc must be a multiple of the sublane packing
    (f32 -> 8, bf16 -> 16, int8 -> 32) or equal C to satisfy (8, 128) tiling.
    Returns None when no tile fits VMEM (caller uses the chunked fallback)."""
    sub = 8 * max(1, 4 // itemsize)
    cands = sorted({t for t in range(sub, C, sub) if C % t == 0} | {C})
    fits = [t for t in cands if _resident_bytes(B, t, HW, itemsize) <= budget_bytes]
    if not fits:
        return None
    block_bytes = lambda t: B * t * HW * itemsize
    target = 4 * 1024 * 1024          # DMA efficiency plateaus past a few MiB
    good = [t for t in fits if C // t >= 2 and block_bytes(t) >= target]
    if good:
        return min(good)              # most grid steps with big-enough blocks
    multi = [t for t in fits if C // t >= 2]
    if multi:                         # small problem: keep both v7x TCs busy
        okish = [t for t in multi if block_bytes(t) >= (1 << 20)]
        return min(okish) if okish else max(multi)
    return max(fits)                  # tiny C: a single-step grid is all we can do


# ----------------------------------------------------------------------------
# Pallas-call wrappers.
# ----------------------------------------------------------------------------
def _bn2d_single(x3, g3, b3, tc, budget, vmem_limit):
    B, C, HW = x3.shape
    itemsize = x3.dtype.itemsize
    n_steps = C // tc
    x_block_bytes = B * tc * HW * itemsize
    # 3-deep input pipeline only when there are enough steps to benefit and the
    # extra buffer still fits the VMEM budget (matters on v7x's 64 MiB VMEM).
    use_buf3 = (n_steps >= 3 and
                _resident_bytes(B, tc, HW, itemsize) + x_block_bytes <= budget)
    if use_buf3:
        x_spec = pl.BlockSpec((B, tc, HW), lambda c: (0, c, 0),
                              pipeline_mode=pl.Buffered(3))
    else:
        x_spec = pl.BlockSpec((B, tc, HW), lambda c: (0, c, 0))

    return pl.pallas_call(
        _bn2d_kernel,
        out_shape=jax.ShapeDtypeStruct((B, C, HW), x3.dtype),
        grid_spec=pl.GridSpec(
            grid=(n_steps,),
            in_specs=[
                x_spec,                                            # x
                pl.BlockSpec((1, tc, 1), lambda c: (0, c, 0)),     # gamma
                pl.BlockSpec((1, tc, 1), lambda c: (0, c, 0)),     # beta
            ],
            out_specs=pl.BlockSpec((B, tc, HW), lambda c: (0, c, 0)),
        ),
        compiler_params=pltpu.CompilerParams(
            dimension_semantics=("parallel",),   # channel blocks are independent
            vmem_limit_bytes=vmem_limit,
        ),
        cost_estimate=pl.CostEstimate(
            flops=7 * B * C * HW,
            transcendentals=C,
            bytes_accessed=2 * B * C * HW * itemsize + 2 * C * 4,
        ),
    )(x3, g3, b3)


def _bn2d_chunked(x3, g3, b3, budget, vmem_limit):
    """Fallback when a (B, tc, HW) block exceeds VMEM: chunk over the batch axis
    with a reduction grid axis.  3 kernels (mean, squared-diff, apply) keep the
    two-pass variance numerics of the reference."""
    B, C, HW = x3.shape
    itemsize = x3.dtype.itemsize
    n = B * HW
    tc = _choose_channel_tile(1, C, HW, itemsize, budget)
    if tc is None:
        # TODO(synk): also chunk the H*W axis (needs a 128-multiple spatial tile)
        # for gigantic single-image channels; plain XLA keeps this path correct.
        xf = x3.astype(jnp.float32)
        mean = jnp.mean(xf, axis=(0, 2), keepdims=True)
        var = jnp.sum((xf - mean) ** 2, axis=(0, 2), keepdims=True) / (n - 1)
        return (g3 * (xf - mean) * lax.rsqrt(var + jnp.float32(1e-20))
                + b3).astype(x3.dtype)

    grid = (C // tc, B)                      # reduction (batch) axis last
    x_spec = pl.BlockSpec((1, tc, HW), lambda c, b: (b, c, 0))
    stat_spec = pl.BlockSpec((tc, 1), lambda c, b: (c, 0))
    stats_params = pltpu.CompilerParams(
        dimension_semantics=("parallel", "arbitrary"),
        vmem_limit_bytes=vmem_limit)

    sums = pl.pallas_call(
        _sum_kernel,
        out_shape=jax.ShapeDtypeStruct((C, 1), jnp.float32),
        grid_spec=pl.GridSpec(grid=grid, in_specs=[x_spec], out_specs=stat_spec),
        compiler_params=stats_params,
    )(x3)
    mean = sums * jnp.float32(1.0 / n)                       # (C, 1), tiny XLA op

    ssq = pl.pallas_call(
        _ssq_kernel,
        out_shape=jax.ShapeDtypeStruct((C, 1), jnp.float32),
        grid_spec=pl.GridSpec(grid=grid, in_specs=[x_spec, stat_spec],
                              out_specs=stat_spec),
        compiler_params=stats_params,
    )(x3, mean)

    inv_nm1 = jnp.float32(1.0 / (n - 1)) if n > 1 else jnp.float32(jnp.nan)
    var = ssq * inv_nm1
    inv_std = lax.rsqrt(var + jnp.float32(1e-20))
    scale = g3.reshape(C, 1) * inv_std                       # (C, 1)
    shift = b3.reshape(C, 1) - mean * scale

    return pl.pallas_call(
        _apply_kernel,
        out_shape=jax.ShapeDtypeStruct((B, C, HW), x3.dtype),
        grid_spec=pl.GridSpec(grid=grid,
                              in_specs=[x_spec, stat_spec, stat_spec],
                              out_specs=x_spec),
        compiler_params=pltpu.CompilerParams(
            dimension_semantics=("parallel", "parallel"),
            vmem_limit_bytes=vmem_limit),
    )(x3, scale, shift)


def bn2d_ref_pallas(x, gamma, beta):
    """x: (B, C, H, W) (NCHW, like PyTorch). gamma/beta: (C,)."""
    B, C, H, W = x.shape
    HW = H * W
    itemsize = x.dtype.itemsize

    # Lane density: the block's last dim maps to the 128 lanes.  If H*W is not
    # a 128 multiple but B*H*W is, a one-time channel-major relayout makes all
    # loads/stores lane-dense (one extra XLA transpose pass each way).
    relayout = (HW % 128 != 0) and ((B * HW) % 128 == 0)
    if relayout:
        x3 = jnp.transpose(x, (1, 0, 2, 3)).reshape(1, C, B * HW)
        Bk, HWk = 1, B * HW
    else:
        x3 = x.reshape(B, C, HW)             # free reshape, no extra HBM pass
        Bk, HWk = B, HW
    g3 = gamma.reshape(1, C, 1).astype(jnp.float32)
    b3 = beta.reshape(1, C, 1).astype(jnp.float32)

    # Generation-aware VMEM budgets (v7x: 64 MiB physical, v5e/v6e: 128 MiB).
    phys = _tpu_vmem_bytes()
    budget = int(phys * 0.60)                # pipeline blocks + kernel temporaries
    vmem_limit = int(phys * 0.85)            # scoped limit, always below physical

    tc = _choose_channel_tile(Bk, C, HWk, itemsize, budget)
    if tc is None:
        out3 = _bn2d_chunked(x3, g3, b3, budget, vmem_limit)
    else:
        out3 = _bn2d_single(x3, g3, b3, tc, budget, vmem_limit)

    if relayout:
        return jnp.transpose(out3.reshape(C, B, H, W), (1, 0, 2, 3))
    return out3.reshape(B, C, H, W)


if __name__ == "__main__":
    key = jax.random.PRNGKey(0)
    B, C, H, W = 2, 4, 16, 16
    x = jax.random.normal(key, (B, C, H, W), dtype=jnp.float32)

    # deterministic parameter init, matching BN2dRef.__init__:
    # beta = zeros(C), gamma = ones(C)
    beta = jnp.zeros((C,), dtype=jnp.float32)
    gamma = jnp.ones((C,), dtype=jnp.float32)

    out = bn2d_ref_pallas(x, gamma, beta)
    out = jax.block_until_ready(out)

    # sanity check against plain-JAX reference (unbiased variance, eps=1e-20)
    xr = jnp.transpose(x, (1, 0, 2, 3)).reshape(C, -1)
    mean = jnp.mean(xr, axis=-1).reshape(1, C, 1, 1)
    var = jnp.var(xr, axis=-1, ddof=1).reshape(1, C, 1, 1)
    ref = gamma.reshape(1, C, 1, 1) * (x - mean) / jnp.sqrt(var + 1e-20) \
        + beta.reshape(1, C, 1, 1)
    assert jnp.allclose(out, ref, atol=1e-5, rtol=1e-5), "mismatch vs reference"

    print("KERNEL_OK")
</pallas_src>

<mosaic_0001>
module attributes {stable_mosaic.version = 11 : i64} {
  func.func @_bn2d_kernel(%arg0: i32, %arg1: memref<2x4x256xf32, #tpu.memory_space<vmem>>, %arg2: memref<1x4x1xf32, #tpu.memory_space<vmem>>, %arg3: memref<1x4x1xf32, #tpu.memory_space<vmem>>, %arg4: memref<2x4x256xf32, #tpu.memory_space<vmem>>) attributes {dimension_semantics = [#tpu.dimension_semantics<parallel>], iteration_bounds = array<i64: 1>, scalar_prefetch = 0 : i64, scratch_operands = 0 : i64, tpu.core_type = #tpu.core_type<tc>, window_params = [{transform_indices = @transform_0, window_bounds = array<i64: 2, 4, 256>}, {transform_indices = @transform_1, window_bounds = array<i64: 1, 4, 1>}, {transform_indices = @transform_2, window_bounds = array<i64: 1, 4, 1>}, {transform_indices = @transform_3, window_bounds = array<i64: 2, 4, 256>}]} {
    %c0 = arith.constant 0 : index
    %c0_0 = arith.constant 0 : index
    %c0_1 = arith.constant 0 : index
    %0 = vector.load %arg1[%c0, %c0_0, %c0_1] : memref<2x4x256xf32, #tpu.memory_space<vmem>>, vector<2x4x256xf32>
    %cst = arith.constant dense<0.000000e+00> : vector<4x256xf32>
    %1 = vector.multi_reduction <add>, %0, %cst [0] : vector<2x4x256xf32> to vector<4x256xf32>
    %2 = vector.shape_cast %1 : vector<4x256xf32> to vector<1x4x256xf32>
    %cst_2 = arith.constant dense<0.000000e+00> : vector<1x4xf32>
    %3 = vector.multi_reduction <add>, %2, %cst_2 [2] : vector<1x4x256xf32> to vector<1x4xf32>
    %4 = vector.shape_cast %3 : vector<1x4xf32> to vector<1x4x1xf32>
    %cst_3 = arith.constant 0.001953125 : f32
    %5 = vector.broadcast %cst_3 : f32 to vector<1x4x1xf32>
    %6 = arith.mulf %4, %5 : vector<1x4x1xf32>
    %7 = vector.broadcast %6 : vector<1x4x1xf32> to vector<2x4x256xf32>
    %8 = arith.subf %0, %7 : vector<2x4x256xf32>
    %9 = arith.mulf %8, %8 : vector<2x4x256xf32>
    %cst_4 = arith.constant dense<0.000000e+00> : vector<4x256xf32>
    %10 = vector.multi_reduction <add>, %9, %cst_4 [0] : vector<2x4x256xf32> to vector<4x256xf32>
    %11 = vector.shape_cast %10 : vector<4x256xf32> to vector<1x4x256xf32>
    %cst_5 = arith.constant dense<0.000000e+00> : vector<1x4xf32>
    %12 = vector.multi_reduction <add>, %11, %cst_5 [2] : vector<1x4x256xf32> to vector<1x4xf32>
    %13 = vector.shape_cast %12 : vector<1x4xf32> to vector<1x4x1xf32>
    %cst_6 = arith.constant 0.00195694715 : f32
    %14 = vector.broadcast %cst_6 : f32 to vector<1x4x1xf32>
    %15 = arith.mulf %13, %14 : vector<1x4x1xf32>
    %cst_7 = arith.constant 9.99999968E-21 : f32
    %16 = vector.broadcast %cst_7 : f32 to vector<1x4x1xf32>
    %17 = arith.addf %15, %16 : vector<1x4x1xf32>
    %18 = math.rsqrt %17 : vector<1x4x1xf32>
    %c0_8 = arith.constant 0 : index
    %c0_9 = arith.constant 0 : index
    %c0_10 = arith.constant 0 : index
    %19 = vector.load %arg2[%c0_8, %c0_9, %c0_10] : memref<1x4x1xf32, #tpu.memory_space<vmem>>, vector<1x4x1xf32>
    %20 = arith.mulf %19, %18 : vector<1x4x1xf32>
    %c0_11 = arith.constant 0 : index
    %c0_12 = arith.constant 0 : index
    %c0_13 = arith.constant 0 : index
    %21 = vector.load %arg3[%c0_11, %c0_12, %c0_13] : memref<1x4x1xf32, #tpu.memory_space<vmem>>, vector<1x4x1xf32>
    %22 = arith.mulf %6, %20 : vector<1x4x1xf32>
    %23 = arith.subf %21, %22 : vector<1x4x1xf32>
    %24 = vector.broadcast %20 : vector<1x4x1xf32> to vector<2x4x256xf32>
    %25 = arith.mulf %0, %24 : vector<2x4x256xf32>
    %26 = vector.broadcast %23 : vector<1x4x1xf32> to vector<2x4x256xf32>
    %27 = arith.addf %25, %26 : vector<2x4x256xf32>
    %c0_14 = arith.constant 0 : index
    %c0_15 = arith.constant 0 : index
    %c0_16 = arith.constant 0 : index
    %28 = vector.load %arg4[%c0_14, %c0_15, %c0_16] : memref<2x4x256xf32, #tpu.memory_space<vmem>>, vector<2x4x256xf32>
    tpu.vector_store %arg4[%c0_14, %c0_15, %c0_16], %27 {strides = array<i32>} : memref<2x4x256xf32, #tpu.memory_space<vmem>>, vector<2x4x256xf32>,
    return
  }
  func.func @transform_0(%arg0: i32) -> (i32, i32, i32) {
    %c0_i32 = arith.constant 0 : i32
    %c0_i32_0 = arith.constant 0 : i32
    %c0_i32_1 = arith.constant 0 : i32
    return %c0_i32, %arg0, %c0_i32_0 : i32, i32, i32
  }
  func.func @transform_1(%arg0: i32) -> (i32, i32, i32) {
    %c0_i32 = arith.constant 0 : i32
    %c0_i32_0 = arith.constant 0 : i32
    %c0_i32_1 = arith.constant 0 : i32
    return %c0_i32, %arg0, %c0_i32_0 : i32, i32, i32
  }
  func.func @transform_2(%arg0: i32) -> (i32, i32, i32) {
    %c0_i32 = arith.constant 0 : i32
    %c0_i32_0 = arith.constant 0 : i32
    %c0_i32_1 = arith.constant 0 : i32
    return %c0_i32, %arg0, %c0_i32_0 : i32, i32, i32
  }
  func.func @transform_3(%arg0: i32) -> (i32, i32, i32) {
    %c0_i32 = arith.constant 0 : i32
    %c0_i32_0 = arith.constant 0 : i32
    %c0_i32_1 = arith.constant 0 : i32
    return %c0_i32, %arg0, %c0_i32_0 : i32, i32, i32
  }
}

</mosaic_0001>

<llo_original>
// kernel: tpu_custom_call.1
$region0: #{tpu_custom_call.1}
  #allocation0 [shape = 'u32[]', space=smem, size = 0x4, offset = 0x4, fixed_abs, tag = 'smem constant byte address 0x4 - core index']
  #allocation1 [shape = 'u32[144,128]{1,0:T(1,128)}', space=vmem, size = 0x12000, scoped, tag = 'internal scratch']
  %s0 = inlined_call_operand.hbm [shape: f32[2,4,256], index: 0, kind: input, shape index: {}]
  %s1 = inlined_call_operand.vmem [shape: f32[1,4,1], index: 1, kind: input, shape index: {}]
  %s2 = inlined_call_operand.vmem [shape: f32[1,4,1], index: 2, kind: input, shape index: {}]
  %s3 = inlined_call_operand.hbm [shape: f32[2,4,256], index: 3, kind: output, shape index: {}]
  %s4 = sld [smem:[#allocation0]]
  $region26: #{tpu_custom_call.1} parent=0
    _
  %s6 = ssub.s32 1, %s4
  %s7 = scalar_select 0, %s6, %s4
  $region1: #{tpu_custom_call.1} parent=0
    #allocation2 [shape = 'u8[8192]{0}', space=vmem, size = 0x2000, scoped, tag = 'input window, operand 0, single buffered']
    #allocation3 [shape = 's32[1]{0}', space=sflag, size = 0x4, scoped, tag = 'scoped memory for tpu_custom_call.1']
    #allocation4 [shape = 's32[1]{0}', space=sflag, size = 0x4, scoped, tag = 'scoped memory for tpu_custom_call.1']
    #allocation5 [shape = 'u8[8192]{0}', space=vmem, size = 0x2000, scoped, tag = 'output window, operand 0, single buffered']
    %8 = vsyncpa [#allocation3], 0
    %9 = vsyncpa [#allocation4], 0
    // Predicated region
    $region2: #{tpu_custom_call.1} parent=1 // pred_check
      _
    $region3: #{tpu_custom_call.1} parent=1 // pred_check_branch
      %11 = sbr.rel (0) target = $region5
    $region4: #{tpu_custom_call.1} parent=1 // pred_region
      %s13 = ssub.s32 256, 256
      %14 = vsyncadd [#allocation3], %s13
      %s15 = sshll.u32 [#allocation2], 4
      %s16 = int_to_ptr.vmem [resolvable:$true] %s15
      %21 = dma.hbm_to_vmem [thread:$0]  %s0, 256, %s16, [#allocation3], 128, 128, 8
    $region5: #{tpu_custom_call.1} parent=1 // pred_fallthru
      _
    // Predicated region
    $region6: #{tpu_custom_call.1} parent=1 // pred_check
      _
    $region7: #{tpu_custom_call.1} parent=1 // pred_check_branch
      %23 = sbr.rel (0) target = $region9
    $region8: #{tpu_custom_call.1} parent=1 // pred_region
      _
    $region9: #{tpu_custom_call.1} parent=1 // pred_fallthru
      _
    // Predicated region
    $region10: #{tpu_custom_call.1} parent=1 // pred_check
      _
    $region11: #{tpu_custom_call.1} parent=1 // pred_check_branch
      %25 = sbr.rel (0) target = $region13
    $region12: #{tpu_custom_call.1} parent=1 // pred_region
      _
    $region13: #{tpu_custom_call.1} parent=1 // pred_fallthru
      _
    // Predicated region
    $region14: #{tpu_custom_call.1} parent=1 // pred_check
      _
    $region15: #{tpu_custom_call.1} parent=1 // pred_check_branch
      %27 = sbr.rel (0) target = $region17
    $region16: #{tpu_custom_call.1} parent=1 // pred_region
      %28 = dma.done [#allocation3], 256
    $region17: #{tpu_custom_call.1} parent=1 // pred_fallthru
      _
    %v29 = vld [vmem:[#allocation2] sm:$0xff]
    %v30 = vld [vmem:[#allocation2 + $0x8] sm:$0xff]
    %v33 = vcombine.high %v29, %v29
    %v34 = vcombine.high %v30, %v30
    %vm37 = vcmask 1043456
    %v38 = vsel %vm37, %v29, 0.0
    %v39 = vsel %vm37, %v30, 0.0
    %v40 = vadd.f32 %v38, %v39
    %v41 = vsel %vm37, %v33, 0.0
    %v42 = vsel %vm37, %v34, 0.0
    %v43 = vadd.f32 %v41, %v42
    %v44 = vsel %vm37, %v40, 0.0
    %v45 = vsel %vm37, %v43, 0.0
    %v46 = vadd.f32 %v44, %v45
    %47 = vadd.xlane.f32.xlu0 %v46
    %v48 = vpop.xlane.xlu0 %47
    %v49 = vmul.f32 %v48, 0.001953125
    %v52 = vunpack.c.l.s4 839922192
    %v53 = vunpack.c.0.s8 %v52
    %v54 = vlaneseq
    %v55 = vshrl.u32 %v54, 7
    %v56 = vsub.s32 %v53, %v55
    %v57 = vrot.slane %v49, %v56
    %v59 = vsub.f32 %v29, %v57
    %v60 = vsub.f32 %v30, %v57
    %v61 = vmul.f32 %v59, %v59
    %v62 = vmul.f32 %v60, %v60
    %v65 = vcombine.high %v61, %v61
    %v66 = vcombine.high %v62, %v62
    %v69 = vsel %vm37, %v61, 0.0
    %v70 = vsel %vm37, %v62, 0.0
    %v71 = vadd.f32 %v69, %v70
    %v72 = vsel %vm37, %v65, 0.0
    %v73 = vsel %vm37, %v66, 0.0
    %v74 = vadd.f32 %v72, %v73
    %v75 = vsel %vm37, %v71, 0.0
    %v76 = vsel %vm37, %v74, 0.0
    %v77 = vadd.f32 %v75, %v76
    %78 = vadd.xlane.f32.xlu0 %v77
    %v79 = vpop.xlane.xlu0 %78
    %v80 = vmul.f32 %v79, 0.0019569471
    %v81 = vadd.f32 %v80, 1e-20
    %v82 = vrsqrt.pop %v81
    %v83 = vld [vmem:[%s1] sm:$0xf]
    %v84 = vmul.f32 %v83, %v82
    %v85 = vld [vmem:[%s2] sm:$0xf]
    %v86 = vmul.f32 %v49, %v84
    %v87 = vsub.f32 %v85, %v86
    %89 = vset.pattern.permute.xlu0 0
    %90 = vperm.xlu0 %89, %v84
    %v91 = vpop.permute.xlu0 %90
    %v93 = vunpack.c.l.s4 839922192
    %v94 = vunpack.c.0.s8 %v93
    %v95 = vlaneseq
    %v96 = vshrl.u32 %v95, 7
    %v97 = vsub.s32 %v94, %v96
    %v98 = vrot.slane %v91, %v97
    %v100 = vmul.f32 %v29, %v98
    %v101 = vmul.f32 %v30, %v98
    %103 = vset.pattern.permute.xlu0 0
    %104 = vperm.xlu0 %103, %v87
    %v105 = vpop.permute.xlu0 %104
    %v107 = vunpack.c.l.s4 839922192
    %v108 = vunpack.c.0.s8 %v107
    %v109 = vlaneseq
    %v110 = vshrl.u32 %v109, 7
    %v111 = vsub.s32 %v108, %v110
    %v112 = vrot.slane %v105, %v111
    %v114 = vadd.f32 %v100, %v112
    %v115 = vadd.f32 %v101, %v112
    %116 = vst [vmem:[#allocation5] sm:$0xff] %v114
    %117 = vst [vmem:[#allocation5 + $0x8] sm:$0xff] %v115
    // Predicated region
    $region18: #{tpu_custom_call.1} parent=1 // pred_check
      _
    $region19: #{tpu_custom_call.1} parent=1 // pred_check_branch
      %119 = sbr.rel (0) target = $region21
    $region20: #{tpu_custom_call.1} parent=1 // pred_region
      %s121 = ssub.s32 256, 256
      %122 = vsyncadd [#allocation4], %s121
      %s123 = sshll.u32 [#allocation5], 4
      %s124 = int_to_ptr.vmem [resolvable:$true] %s123
      %129 = dma.vmem_to_hbm [thread:$0]  %s124, 256, %s3, [#allocation4], 128, 128, 8
    $region21: #{tpu_custom_call.1} parent=1 // pred_fallthru
      _
    // Predicated region
    $region22: #{tpu_custom_call.1} parent=1 // pred_check
      _
    $region23: #{tpu_custom_call.1} parent=1 // pred_check_branch
      %131 = sbr.rel (0) target = $region25
    $region24: #{tpu_custom_call.1} parent=1 // pred_region
      %132 = dma.done [#allocation4], 256
    $region25: #{tpu_custom_call.1} parent=1 // pred_fallthru
      _
    %133 = vsyncpa [#allocation3], 1
    %134 = vsyncpa [#allocation4], 1

</llo_original>
